<compile_context>
chip_gen: v5e
topology: v5e:2x2
jax: 0.10.0
libtpu: 0.0.40
codegen_flags: <defaults>
</compile_context>

<pallas_src>
import jax
import jax.numpy as jnp
from jax import lax
from jax.experimental import pallas as pl
from jax.experimental.pallas import tpu as pltpu


def mda_kernel(x_ref, w_enc_ref, w_lin_t_ref, w_att_ref, b_att_ref,
               w_lat_ref, w_dec_ref,
               z_ref, enc_ref, rec_ref, out_ref, attn_ref):
    """One batch tile of the MDA forward.

    x_ref      : (M, TB, Dmax) bf16   stacked, zero-padded modality inputs
    w_enc_ref  : (M, Dmax, E)  bf16   stacked encoder weights (W_i^T, zero-padded)
    w_lin_t_ref: (E, E)        bf16   attention embedding weight, transposed
    w_att_ref  : (1, E)        f32    Conv1d(E,1,1) weight as a row (VPU path)
    b_att_ref  : (1, 1)        f32    Conv1d bias (SMEM scalar)
    w_lat_ref  : (L, E)        bf16   latent layer weight (PyTorch layout)
    w_dec_ref  : (E, MDp)      bf16   fused decoder weight (all modalities concat)
    outputs    : z (TB,L), enc (TB,E), latent_rec (TB,E), out (TB,MDp), attn (TB,M)
    """
    f32 = jnp.float32
    M, TB, _ = x_ref.shape

    w_lin_t = w_lin_t_ref[...]                               # (E, E) bf16
    w_att = w_att_ref[...]                                   # (1, E) f32
    b_att = b_att_ref[0, 0]                                  # f32 scalar (SMEM)

    # ---- per-modality encoders: sigmoid(x_m @ W_m^T), bf16 MXU / f32 accum ----
    encs = []
    for m in range(M):                                       # M is small & static
        enc_m = jax.nn.sigmoid(
            jnp.dot(x_ref[m], w_enc_ref[m], preferred_element_type=f32))
        encs.append(enc_m)                                   # (TB, E) f32

    # ---- fused attention path: one tanh matmul over all modalities ----
    enc_all = jnp.concatenate(encs, axis=0)                  # (M*TB, E) f32, sublane concat
    emb_all = jnp.tanh(
        jnp.dot(enc_all.astype(w_lin_t.dtype), w_lin_t,
                preferred_element_type=f32))                 # (M*TB, E) f32
    # Conv1d(E,1,1) == dot with a length-E vector: VPU multiply + lane reduce
    att_all = jnp.sum(emb_all * w_att, axis=-1, keepdims=True) + b_att   # (M*TB, 1)
    att_cols = [att_all[m * TB:(m + 1) * TB] for m in range(M)]          # (TB, 1) each

    # softmax over the modality axis, held column-wise (no lane concat of 1-wide cols)
    att_max = att_cols[0]
    for m in range(1, M):
        att_max = jnp.maximum(att_max, att_cols[m])
    exps = [jnp.exp(c - att_max) for c in att_cols]
    denom = exps[0]
    for m in range(1, M):
        denom = denom + exps[m]
    inv_denom = 1.0 / denom
    attns = [e * inv_denom for e in exps]                    # (TB, 1) each
    for m in range(M):
        attn_ref[:, m:m + 1] = attns[m]

    # attention-weighted sum of per-modality encodings
    enc_sum = attns[0] * encs[0]
    for m in range(1, M):
        enc_sum = enc_sum + attns[m] * encs[m]
    enc_ref[...] = enc_sum                                   # (TB, E)

    # ---- latent bottleneck: z = sigmoid(enc @ W_lat^T), rec = sigmoid(z @ W_lat) ----
    w_lat = w_lat_ref[...]                                   # (L, E) bf16
    z = jax.nn.sigmoid(
        lax.dot_general(enc_sum.astype(w_lat.dtype), w_lat,
                        (((1,), (1,)), ((), ())),
                        preferred_element_type=f32))         # (TB, L)
    z_ref[...] = z
    rec = jax.nn.sigmoid(
        jnp.dot(z.astype(w_lat.dtype), w_lat,
                preferred_element_type=f32))                 # (TB, E)
    rec_ref[...] = rec

    # ---- fused decoder: one matmul, one sigmoid, one lane-dense full-width store ----
    out_ref[...] = jax.nn.sigmoid(
        jnp.dot(rec.astype(w_dec_ref.dtype), w_dec_ref[...],
                preferred_element_type=f32))                 # (TB, MDp)


def mda_forward(Xs, w_enc_list, w_lin, w_att, b_att, w_lat):
    """Wrapper: pads/stacks modalities, calls the Pallas kernel, unpacks results.

    Xs         : list of (B, D_i) arrays
    w_enc_list : list of (E, D_i) encoder weights (PyTorch Linear layout)
    w_lin      : (E, E)   MDA_Layer.lin weight
    w_att      : (E,)     Conv1d(E, 1, 1) weight, squeezed
    b_att      : ()       Conv1d bias
    w_lat      : (L, E)   latent layer weight
    """
    M = len(Xs)
    B = Xs[0].shape[0]
    E = w_lin.shape[0]
    L = w_lat.shape[0]
    dims = [int(x.shape[1]) for x in Xs]
    Dmax = max(dims)

    # batch tiling: whole (sublane-rounded) batch when small, 128-row tiles when large
    if B <= 128:
        TB = ((B + 7) // 8) * 8
    else:
        TB = 128
    Bp = ((B + TB - 1) // TB) * TB
    nb = Bp // TB

    MD = M * Dmax
    MDp = ((MD + 127) // 128) * 128        # lane-dense reconstruction slab width

    f32, bf16 = jnp.float32, jnp.bfloat16

    # stacked, zero-padded modality inputs / encoder weights (bf16 matmul operands)
    x_stk = jnp.stack(
        [jnp.pad(jnp.asarray(x, f32), ((0, Bp - B), (0, Dmax - x.shape[1])))
         for x in Xs], axis=0).astype(bf16)                            # (M, Bp, Dmax)
    w_enc_stk = jnp.stack(
        [jnp.pad(jnp.asarray(w, f32).T, ((0, Dmax - w.shape[1]), (0, 0)))
         for w in w_enc_list], axis=0).astype(bf16)                    # (M, Dmax, E)

    # fused decoder weight: all modality weights concatenated along the lane axis
    w_dec = jnp.zeros((E, MDp), f32)
    for m, w in enumerate(w_enc_list):                                 # w: (E, D_m)
        w_dec = w_dec.at[:, m * Dmax:m * Dmax + w.shape[1]].set(jnp.asarray(w, f32))
    w_dec = w_dec.astype(bf16)                                         # (E, MDp)

    w_lin_t = jnp.asarray(w_lin, f32).T.astype(bf16)                   # (E, E)
    w_att_row = jnp.asarray(w_att, f32).reshape(1, E)                  # (1, E) f32
    b_att_c = jnp.asarray(b_att, f32).reshape(1, 1)                    # SMEM scalar
    w_lat_c = jnp.asarray(w_lat, f32).astype(bf16)                     # (L, E)

    z, enc, rec, out_all, attn = pl.pallas_call(
        mda_kernel,
        grid=(nb,),
        in_specs=[
            pl.BlockSpec((M, TB, Dmax), lambda i: (0, i, 0)),          # x tile
            pl.BlockSpec((M, Dmax, E), lambda i: (0, 0, 0)),           # enc weights
            pl.BlockSpec((E, E), lambda i: (0, 0)),                    # lin^T
            pl.BlockSpec((1, E), lambda i: (0, 0)),                    # att weight row
            pl.BlockSpec(memory_space=pltpu.MemorySpace.SMEM),         # att bias
            pl.BlockSpec((L, E), lambda i: (0, 0)),                    # latent weight
            pl.BlockSpec((E, MDp), lambda i: (0, 0)),                  # fused decoder
        ],
        out_specs=(
            pl.BlockSpec((TB, L), lambda i: (i, 0)),
            pl.BlockSpec((TB, E), lambda i: (i, 0)),
            pl.BlockSpec((TB, E), lambda i: (i, 0)),
            pl.BlockSpec((TB, MDp), lambda i: (i, 0)),
            pl.BlockSpec((TB, M), lambda i: (i, 0)),
        ),
        out_shape=(
            jax.ShapeDtypeStruct((Bp, L), f32),      # z
            jax.ShapeDtypeStruct((Bp, E), f32),      # enc (attention-summed)
            jax.ShapeDtypeStruct((Bp, E), f32),      # latent_rec
            jax.ShapeDtypeStruct((Bp, MDp), f32),    # fused reconstructions
            jax.ShapeDtypeStruct((Bp, M), f32),      # attn.squeeze()
        ),
        compiler_params=pltpu.CompilerParams(
            dimension_semantics=("parallel",),
            vmem_limit_bytes=32 * 1024 * 1024),
    )(x_stk, w_enc_stk, w_lin_t, w_att_row, b_att_c, w_lat_c, w_dec)

    outs = [out_all[:B, m * Dmax:m * Dmax + dims[m]] for m in range(M)]
    return z[:B], enc[:B], rec[:B], outs, attn[:B]


def mda_reference(Xs, w_enc_list, w_lin, w_att, b_att, w_lat):
    """Pure-JAX mirror of the PyTorch forward (dropout = identity) using the same
    bf16-operand / f32-accumulate matmul numerics as the kernel."""
    bf16, f32 = jnp.bfloat16, jnp.float32

    def mm(a, b):
        return jnp.dot(a.astype(bf16), b.astype(bf16), preferred_element_type=f32)

    M = len(Xs)
    encs = [jax.nn.sigmoid(mm(Xs[i], w_enc_list[i].T)) for i in range(M)]
    embs = [jnp.tanh(mm(e, w_lin.T)) for e in encs]
    att = jnp.stack(
        [jnp.sum(e * w_att[None, :], axis=-1) + b_att for e in embs], axis=1)  # (B, M)
    attn = jax.nn.softmax(att, axis=1)
    enc_sum = sum(attn[:, i:i + 1] * encs[i] for i in range(M))
    z = jax.nn.sigmoid(mm(enc_sum, w_lat.T))
    rec = jax.nn.sigmoid(mm(z, w_lat))
    outs = [jax.nn.sigmoid(mm(rec, w_enc_list[i])) for i in range(M)]
    return z, enc_sum, rec, outs, attn


def xavier_uniform(key, shape, fan_in, fan_out):
    bound = (6.0 / (fan_in + fan_out)) ** 0.5
    return jax.random.uniform(key, shape, jnp.float32, -bound, bound)


if __name__ == "__main__":
    B = 8
    input_dims = [32, 24, 16]   # three modalities with different feature sizes
    E = 32                      # encoding_dims[0] (all encoding dims must be equal)
    L = 16                      # latent_dim
    M = len(input_dims)

    key = jax.random.PRNGKey(0)
    keys = jax.random.split(key, 2 * M + 4)

    Xs = [jax.random.normal(keys[i], (B, input_dims[i]), jnp.float32)
          for i in range(M)]
    # encoder Linear(D_i, E, bias=False) weights, shape (E, D_i)
    w_enc_list = [xavier_uniform(keys[M + i], (E, input_dims[i]),
                                 input_dims[i], E) for i in range(M)]
    # MDA_Layer.lin: Linear(E, E, bias=False)
    w_lin = xavier_uniform(keys[2 * M], (E, E), E, E)
    # Attention.att_w: Conv1d(E, 1, 1) -> weight (1, E, 1) squeezed to (E,), bias ()
    w_att = xavier_uniform(keys[2 * M + 1], (E,), E, 1)
    b_att = jax.random.uniform(keys[2 * M + 2], (), jnp.float32,
                               -1.0 / (E ** 0.5), 1.0 / (E ** 0.5))
    # latent_layer: Linear(E, L, bias=False), weight (L, E)
    w_lat = xavier_uniform(keys[2 * M + 3], (L, E), E, L)

    z, enc, rec, outs, attn = jax.block_until_ready(
        mda_forward(Xs, w_enc_list, w_lin, w_att, b_att, w_lat))

    z_r, enc_r, rec_r, outs_r, attn_r = mda_reference(
        Xs, w_enc_list, w_lin, w_att, b_att, w_lat)

    tol = dict(rtol=1e-3, atol=1e-3)
    assert jnp.allclose(z, z_r, **tol)
    assert jnp.allclose(enc, enc_r, **tol)
    assert jnp.allclose(rec, rec_r, **tol)
    assert jnp.allclose(attn, attn_r, **tol)
    assert jnp.allclose(jnp.sum(attn, axis=1), jnp.ones((B,)), rtol=1e-5, atol=1e-5)
    for o, o_r in zip(outs, outs_r):
        assert jnp.allclose(o, o_r, **tol)

    print("KERNEL_OK")
</pallas_src>

<mosaic_0001>
module attributes {stable_mosaic.version = 11 : i64} {
  func.func @mda_kernel(%arg0: i32, %arg1: memref<3x8x32xbf16, #tpu.memory_space<vmem>>, %arg2: memref<3x32x32xbf16, #tpu.memory_space<vmem>>, %arg3: memref<32x32xbf16, #tpu.memory_space<vmem>>, %arg4: memref<1x32xf32, #tpu.memory_space<vmem>>, %arg5: memref<1x1xf32, #tpu.memory_space<smem>>, %arg6: memref<16x32xbf16, #tpu.memory_space<vmem>>, %arg7: memref<32x128xbf16, #tpu.memory_space<vmem>>, %arg8: memref<8x16xf32, #tpu.memory_space<vmem>>, %arg9: memref<8x32xf32, #tpu.memory_space<vmem>>, %arg10: memref<8x32xf32, #tpu.memory_space<vmem>>, %arg11: memref<8x128xf32, #tpu.memory_space<vmem>>, %arg12: memref<8x3xf32, #tpu.memory_space<vmem>>) attributes {dimension_semantics = [#tpu.dimension_semantics<parallel>], iteration_bounds = array<i64: 1>, scalar_prefetch = 0 : i64, scratch_operands = 0 : i64, tpu.core_type = #tpu.core_type<tc>, window_params = [{transform_indices = @transform_0, window_bounds = array<i64: 3, 8, 32>}, {pipeline_mode = #tpu.pipeline_mode<synchronous>, transform_indices = @transform_1, window_bounds = array<i64: 3, 32, 32>}, {pipeline_mode = #tpu.pipeline_mode<synchronous>, transform_indices = @transform_2, window_bounds = array<i64: 32, 32>}, {pipeline_mode = #tpu.pipeline_mode<synchronous>, transform_indices = @transform_3, window_bounds = array<i64: 1, 32>}, {transform_indices = @transform_4, window_bounds = array<i64: 1, 1>}, {pipeline_mode = #tpu.pipeline_mode<synchronous>, transform_indices = @transform_5, window_bounds = array<i64: 16, 32>}, {pipeline_mode = #tpu.pipeline_mode<synchronous>, transform_indices = @transform_6, window_bounds = array<i64: 32, 128>}, {transform_indices = @transform_7, window_bounds = array<i64: 8, 16>}, {transform_indices = @transform_8, window_bounds = array<i64: 8, 32>}, {transform_indices = @transform_9, window_bounds = array<i64: 8, 32>}, {transform_indices = @transform_10, window_bounds = array<i64: 8, 128>}, {transform_indices = @transform_11, window_bounds = array<i64: 8, 3>}]} {
    %c0 = arith.constant 0 : index
    %c0_0 = arith.constant 0 : index
    %0 = vector.load %arg3[%c0, %c0_0] : memref<32x32xbf16, #tpu.memory_space<vmem>>, vector<32x32xbf16>
    %c0_1 = arith.constant 0 : index
    %c0_2 = arith.constant 0 : index
    %1 = vector.load %arg4[%c0_1, %c0_2] : memref<1x32xf32, #tpu.memory_space<vmem>>, vector<1x32xf32>
    %c0_3 = arith.constant 0 : index
    %c0_4 = arith.constant 0 : index
    %2 = memref.load %arg5[%c0_3, %c0_4] : memref<1x1xf32, #tpu.memory_space<smem>>
    %c0_5 = arith.constant 0 : index
    %c0_6 = arith.constant 0 : index
    %c0_7 = arith.constant 0 : index
    %3 = vector.load %arg1[%c0_5, %c0_6, %c0_7] : memref<3x8x32xbf16, #tpu.memory_space<vmem>>, vector<1x8x32xbf16>
    %4 = vector.shape_cast %3 : vector<1x8x32xbf16> to vector<8x32xbf16>
    %c0_8 = arith.constant 0 : index
    %c0_9 = arith.constant 0 : index
    %c0_10 = arith.constant 0 : index
    %5 = vector.load %arg2[%c0_8, %c0_9, %c0_10] : memref<3x32x32xbf16, #tpu.memory_space<vmem>>, vector<1x32x32xbf16>
    %6 = vector.shape_cast %5 : vector<1x32x32xbf16> to vector<32x32xbf16>
    %cst = arith.constant dense<0.000000e+00> : vector<8x32xf32>
    %7 = tpu.matmul %4, %6, %cst {dimension_numbers = #tpu.dot_dimension_numbers<[1], [0], [0], [1], [0, 0, 1, 1], [], []>} : vector<8x32xbf16>, vector<32x32xbf16>, vector<8x32xf32> -> vector<8x32xf32>
    %8 = arith.negf %7 : vector<8x32xf32>
    %9 = math.exp %8 : vector<8x32xf32>
    %cst_11 = arith.constant 1.000000e+00 : f32
    %10 = vector.broadcast %cst_11 : f32 to vector<8x32xf32>
    %11 = arith.addf %10, %9 : vector<8x32xf32>
    %12 = arith.divf %10, %11 : vector<8x32xf32>
    %c1 = arith.constant 1 : index
    %c0_12 = arith.constant 0 : index
    %c0_13 = arith.constant 0 : index
    %13 = vector.load %arg1[%c1, %c0_12, %c0_13] : memref<3x8x32xbf16, #tpu.memory_space<vmem>>, vector<1x8x32xbf16>
    %14 = vector.shape_cast %13 : vector<1x8x32xbf16> to vector<8x32xbf16>
    %c1_14 = arith.constant 1 : index
    %c0_15 = arith.constant 0 : index
    %c0_16 = arith.constant 0 : index
    %15 = vector.load %arg2[%c1_14, %c0_15, %c0_16] : memref<3x32x32xbf16, #tpu.memory_space<vmem>>, vector<1x32x32xbf16>
    %16 = vector.shape_cast %15 : vector<1x32x32xbf16> to vector<32x32xbf16>
    %cst_17 = arith.constant dense<0.000000e+00> : vector<8x32xf32>
    %17 = tpu.matmul %14, %16, %cst_17 {dimension_numbers = #tpu.dot_dimension_numbers<[1], [0], [0], [1], [0, 0, 1, 1], [], []>} : vector<8x32xbf16>, vector<32x32xbf16>, vector<8x32xf32> -> vector<8x32xf32>
    %18 = arith.negf %17 : vector<8x32xf32>
    %19 = math.exp %18 : vector<8x32xf32>
    %cst_18 = arith.constant 1.000000e+00 : f32
    %20 = vector.broadcast %cst_18 : f32 to vector<8x32xf32>
    %21 = arith.addf %20, %19 : vector<8x32xf32>
    %22 = arith.divf %20, %21 : vector<8x32xf32>
    %c2 = arith.constant 2 : index
    %c0_19 = arith.constant 0 : index
    %c0_20 = arith.constant 0 : index
    %23 = vector.load %arg1[%c2, %c0_19, %c0_20] : memref<3x8x32xbf16, #tpu.memory_space<vmem>>, vector<1x8x32xbf16>
    %24 = vector.shape_cast %23 : vector<1x8x32xbf16> to vector<8x32xbf16>
    %c2_21 = arith.constant 2 : index
    %c0_22 = arith.constant 0 : index
    %c0_23 = arith.constant 0 : index
    %25 = vector.load %arg2[%c2_21, %c0_22, %c0_23] : memref<3x32x32xbf16, #tpu.memory_space<vmem>>, vector<1x32x32xbf16>
    %26 = vector.shape_cast %25 : vector<1x32x32xbf16> to vector<32x32xbf16>
    %cst_24 = arith.constant dense<0.000000e+00> : vector<8x32xf32>
    %27 = tpu.matmul %24, %26, %cst_24 {dimension_numbers = #tpu.dot_dimension_numbers<[1], [0], [0], [1], [0, 0, 1, 1], [], []>} : vector<8x32xbf16>, vector<32x32xbf16>, vector<8x32xf32> -> vector<8x32xf32>
    %28 = arith.negf %27 : vector<8x32xf32>
    %29 = math.exp %28 : vector<8x32xf32>
    %cst_25 = arith.constant 1.000000e+00 : f32
    %30 = vector.broadcast %cst_25 : f32 to vector<8x32xf32>
    %31 = arith.addf %30, %29 : vector<8x32xf32>
    %32 = arith.divf %30, %31 : vector<8x32xf32>
    %33 = tpu.concatenate %12, %22, %32 in 0 : vector<8x32xf32>, vector<8x32xf32>, vector<8x32xf32> -> vector<24x32xf32>
    %34 = arith.truncf %33 : vector<24x32xf32> to vector<24x32xbf16>
    %cst_26 = arith.constant dense<0.000000e+00> : vector<24x32xf32>
    %35 = tpu.matmul %34, %0, %cst_26 {dimension_numbers = #tpu.dot_dimension_numbers<[1], [0], [0], [1], [0, 0, 1, 1], [], []>} : vector<24x32xbf16>, vector<32x32xbf16>, vector<24x32xf32> -> vector<24x32xf32>
    %36 = math.tanh %35 : vector<24x32xf32>
    %37 = vector.broadcast %1 : vector<1x32xf32> to vector<24x32xf32>
    %38 = arith.mulf %36, %37 : vector<24x32xf32>
    %cst_27 = arith.constant dense<0.000000e+00> : vector<24xf32>
    %39 = vector.multi_reduction <add>, %38, %cst_27 [1] : vector<24x32xf32> to vector<24xf32>
    %40 = vector.shape_cast %39 : vector<24xf32> to vector<24x1xf32>
    %41 = vector.broadcast %2 : f32 to vector<24x1xf32>
    %42 = arith.addf %40, %41 : vector<24x1xf32>
    %43 = vector.extract_strided_slice %42 {offsets = [0, 0], sizes = [8, 1], strides = [1, 1]} : vector<24x1xf32> to vector<8x1xf32>
    %44 = vector.extract_strided_slice %42 {offsets = [8, 0], sizes = [8, 1], strides = [1, 1]} : vector<24x1xf32> to vector<8x1xf32>
    %45 = vector.extract_strided_slice %42 {offsets = [16, 0], sizes = [8, 1], strides = [1, 1]} : vector<24x1xf32> to vector<8x1xf32>
    %46 = arith.maximumf %43, %44 : vector<8x1xf32>
    %47 = arith.maximumf %46, %45 : vector<8x1xf32>
    %48 = arith.subf %43, %47 : vector<8x1xf32>
    %49 = math.exp %48 : vector<8x1xf32>
    %50 = arith.subf %44, %47 : vector<8x1xf32>
    %51 = math.exp %50 : vector<8x1xf32>
    %52 = arith.subf %45, %47 : vector<8x1xf32>
    %53 = math.exp %52 : vector<8x1xf32>
    %54 = arith.addf %49, %51 : vector<8x1xf32>
    %55 = arith.addf %54, %53 : vector<8x1xf32>
    %cst_28 = arith.constant 1.000000e+00 : f32
    %56 = vector.broadcast %cst_28 : f32 to vector<8x1xf32>
    %57 = arith.divf %56, %55 : vector<8x1xf32>
    %58 = arith.mulf %49, %57 : vector<8x1xf32>
    %59 = arith.mulf %51, %57 : vector<8x1xf32>
    %60 = arith.mulf %53, %57 : vector<8x1xf32>
    %c0_29 = arith.constant 0 : index
    %c0_30 = arith.constant 0 : index
    %61 = vector.load %arg12[%c0_29, %c0_30] : memref<8x3xf32, #tpu.memory_space<vmem>>, vector<8x1xf32>
    tpu.vector_store %arg12[%c0_29, %c0_30], %58 {strides = array<i32>} : memref<8x3xf32, #tpu.memory_space<vmem>>, vector<8x1xf32>,
    %c0_31 = arith.constant 0 : index
    %c1_32 = arith.constant 1 : index
    %62 = vector.load %arg12[%c0_31, %c1_32] : memref<8x3xf32, #tpu.memory_space<vmem>>, vector<8x1xf32>
    tpu.vector_store %arg12[%c0_31, %c1_32], %59 {strides = array<i32>} : memref<8x3xf32, #tpu.memory_space<vmem>>, vector<8x1xf32>,
    %c0_33 = arith.constant 0 : index
    %c2_34 = arith.constant 2 : index
    %63 = vector.load %arg12[%c0_33, %c2_34] : memref<8x3xf32, #tpu.memory_space<vmem>>, vector<8x1xf32>
    tpu.vector_store %arg12[%c0_33, %c2_34], %60 {strides = array<i32>} : memref<8x3xf32, #tpu.memory_space<vmem>>, vector<8x1xf32>,
    %64 = vector.broadcast %58 : vector<8x1xf32> to vector<8x32xf32>
    %65 = arith.mulf %64, %12 : vector<8x32xf32>
    %66 = vector.broadcast %59 : vector<8x1xf32> to vector<8x32xf32>
    %67 = arith.mulf %66, %22 : vector<8x32xf32>
    %68 = arith.addf %65, %67 : vector<8x32xf32>
    %69 = vector.broadcast %60 : vector<8x1xf32> to vector<8x32xf32>
    %70 = arith.mulf %69, %32 : vector<8x32xf32>
    %71 = arith.addf %68, %70 : vector<8x32xf32>
    %c0_35 = arith.constant 0 : index
    %c0_36 = arith.constant 0 : index
    %72 = vector.load %arg9[%c0_35, %c0_36] : memref<8x32xf32, #tpu.memory_space<vmem>>, vector<8x32xf32>
    tpu.vector_store %arg9[%c0_35, %c0_36], %71 {strides = array<i32>} : memref<8x32xf32, #tpu.memory_space<vmem>>, vector<8x32xf32>,
    %c0_37 = arith.constant 0 : index
    %c0_38 = arith.constant 0 : index
    %73 = vector.load %arg6[%c0_37, %c0_38] : memref<16x32xbf16, #tpu.memory_space<vmem>>, vector<16x32xbf16>
    %74 = arith.truncf %71 : vector<8x32xf32> to vector<8x32xbf16>
    %cst_39 = arith.constant dense<0.000000e+00> : vector<8x16xf32>
    %75 = tpu.matmul %74, %73, %cst_39 {dimension_numbers = #tpu.dot_dimension_numbers<[1], [1], [0], [0], [0, 0, 1, 0], [], []>} : vector<8x32xbf16>, vector<16x32xbf16>, vector<8x16xf32> -> vector<8x16xf32>
    %76 = arith.negf %75 : vector<8x16xf32>
    %77 = math.exp %76 : vector<8x16xf32>
    %cst_40 = arith.constant 1.000000e+00 : f32
    %78 = vector.broadcast %cst_40 : f32 to vector<8x16xf32>
    %79 = arith.addf %78, %77 : vector<8x16xf32>
    %80 = arith.divf %78, %79 : vector<8x16xf32>
    %c0_41 = arith.constant 0 : index
    %c0_42 = arith.constant 0 : index
    %81 = vector.load %arg8[%c0_41, %c0_42] : memref<8x16xf32, #tpu.memory_space<vmem>>, vector<8x16xf32>
    tpu.vector_store %arg8[%c0_41, %c0_42], %80 {strides = array<i32>} : memref<8x16xf32, #tpu.memory_space<vmem>>, vector<8x16xf32>,
    %82 = arith.truncf %80 : vector<8x16xf32> to vector<8x16xbf16>
    %cst_43 = arith.constant dense<0.000000e+00> : vector<8x32xf32>
    %83 = tpu.matmul %82, %73, %cst_43 {dimension_numbers = #tpu.dot_dimension_numbers<[1], [0], [0], [1], [0, 0, 1, 1], [], []>} : vector<8x16xbf16>, vector<16x32xbf16>, vector<8x32xf32> -> vector<8x32xf32>
    %84 = arith.negf %83 : vector<8x32xf32>
    %85 = math.exp %84 : vector<8x32xf32>
    %cst_44 = arith.constant 1.000000e+00 : f32
    %86 = vector.broadcast %cst_44 : f32 to vector<8x32xf32>
    %87 = arith.addf %86, %85 : vector<8x32xf32>
    %88 = arith.divf %86, %87 : vector<8x32xf32>
    %c0_45 = arith.constant 0 : index
    %c0_46 = arith.constant 0 : index
    %89 = vector.load %arg10[%c0_45, %c0_46] : memref<8x32xf32, #tpu.memory_space<vmem>>, vector<8x32xf32>
    tpu.vector_store %arg10[%c0_45, %c0_46], %88 {strides = array<i32>} : memref<8x32xf32, #tpu.memory_space<vmem>>, vector<8x32xf32>,
    %90 = arith.truncf %88 : vector<8x32xf32> to vector<8x32xbf16>
    %c0_47 = arith.constant 0 : index
    %c0_48 = arith.constant 0 : index
    %91 = vector.load %arg7[%c0_47, %c0_48] : memref<32x128xbf16, #tpu.memory_space<vmem>>, vector<32x128xbf16>
    %cst_49 = arith.constant dense<0.000000e+00> : vector<8x128xf32>
    %92 = tpu.matmul %90, %91, %cst_49 {dimension_numbers = #tpu.dot_dimension_numbers<[1], [0], [0], [1], [0, 0, 1, 1], [], []>} : vector<8x32xbf16>, vector<32x128xbf16>, vector<8x128xf32> -> vector<8x128xf32>
    %93 = arith.negf %92 : vector<8x128xf32>
    %94 = math.exp %93 : vector<8x128xf32>
    %cst_50 = arith.constant 1.000000e+00 : f32
    %95 = vector.broadcast %cst_50 : f32 to vector<8x128xf32>
    %96 = arith.addf %95, %94 : vector<8x128xf32>
    %97 = arith.divf %95, %96 : vector<8x128xf32>
    %c0_51 = arith.constant 0 : index
    %c0_52 = arith.constant 0 : index
    %98 = vector.load %arg11[%c0_51, %c0_52] : memref<8x128xf32, #tpu.memory_space<vmem>>, vector<8x128xf32>
    tpu.vector_store %arg11[%c0_51, %c0_52], %97 {strides = array<i32>} : memref<8x128xf32, #tpu.memory_space<vmem>>, vector<8x128xf32>,
    return
  }
  func.func @transform_0(%arg0: i32) -> (i32, i32, i32) {
    %c0_i32 = arith.constant 0 : i32
    %c0_i32_0 = arith.constant 0 : i32
    %c0_i32_1 = arith.constant 0 : i32
    return %c0_i32, %arg0, %c0_i32_0 : i32, i32, i32
  }
  func.func @transform_1(%arg0: i32) -> (i32, i32, i32) {
    %c0_i32 = arith.constant 0 : i32
    %c0_i32_0 = arith.constant 0 : i32
    %c0_i32_1 = arith.constant 0 : i32
    %c0_i32_2 = arith.constant 0 : i32
    return %c0_i32, %c0_i32_0, %c0_i32_1 : i32, i32, i32
  }
  func.func @transform_2(%arg0: i32) -> (i32, i32) {
    %c0_i32 = arith.constant 0 : i32
    %c0_i32_0 = arith.constant 0 : i32
    %c0_i32_1 = arith.constant 0 : i32
    return %c0_i32, %c0_i32_0 : i32, i32
  }
  func.func @transform_3(%arg0: i32) -> (i32, i32) {
    %c0_i32 = arith.constant 0 : i32
    %c0_i32_0 = arith.constant 0 : i32
    %c0_i32_1 = arith.constant 0 : i32
    return %c0_i32, %c0_i32_0 : i32, i32
  }
  func.func @transform_4(%arg0: i32) -> (i32, i32) {
    %c0_i32 = arith.constant 0 : i32
    %c0_i32_0 = arith.constant 0 : i32
    %c0_i32_1 = arith.constant 0 : i32
    return %c0_i32, %c0_i32_0 : i32, i32
  }
  func.func @transform_5(%arg0: i32) -> (i32, i32) {
    %c0_i32 = arith.constant 0 : i32
    %c0_i32_0 = arith.constant 0 : i32
    %c0_i32_1 = arith.constant 0 : i32
    return %c0_i32, %c0_i32_0 : i32, i32
  }
  func.func @transform_6(%arg0: i32) -> (i32, i32) {
    %c0_i32 = arith.constant 0 : i32
    %c0_i32_0 = arith.constant 0 : i32
    %c0_i32_1 = arith.constant 0 : i32
    return %c0_i32, %c0_i32_0 : i32, i32
  }
  func.func @transform_7(%arg0: i32) -> (i32, i32) {
    %c0_i32 = arith.constant 0 : i32
    %c0_i32_0 = arith.constant 0 : i32
    return %arg0, %c0_i32 : i32, i32
  }
  func.func @transform_8(%arg0: i32) -> (i32, i32) {
    %c0_i32 = arith.constant 0 : i32
    %c0_i32_0 = arith.constant 0 : i32
    return %arg0, %c0_i32 : i32, i32
  }
  func.func @transform_9(%arg0: i32) -> (i32, i32) {
    %c0_i32 = arith.constant 0 : i32
    %c0_i32_0 = arith.constant 0 : i32
    return %arg0, %c0_i32 : i32, i32
  }
  func.func @transform_10(%arg0: i32) -> (i32, i32) {
    %c0_i32 = arith.constant 0 : i32
    %c0_i32_0 = arith.constant 0 : i32
    return %arg0, %c0_i32 : i32, i32
  }
  func.func @transform_11(%arg0: i32) -> (i32, i32) {
    %c0_i32 = arith.constant 0 : i32
    %c0_i32_0 = arith.constant 0 : i32
    return %arg0, %c0_i32 : i32, i32
  }
}

</mosaic_0001>

<llo_original>
// kernel: tpu_custom_call.1
$region0: #{tpu_custom_call.1}
  #allocation0 [shape = 'u32[]', space=smem, size = 0x4, offset = 0x4, fixed_abs, tag = 'smem constant byte address 0x4 - core index']
  #allocation1 [shape = 'u32[72,128]{1,0:T(1,128)}', space=vmem, size = 0x9000, scoped, tag = 'internal scratch']
  #allocation2 [shape = 'f32[1,1]{1,0:T(1,128)S(6)}', space=smem, size = 0x200, scoped, tag = 'scoped memory for tpu_custom_call.1']
  %s0 = inlined_call_operand.hbm [shape: bf16[3,8,32], index: 0, kind: input, shape index: {}]
  %s1 = inlined_call_operand.hbm [shape: bf16[3,32,32], index: 1, kind: input, shape index: {}]
  %s2 = inlined_call_operand.hbm [shape: bf16[32,32], index: 2, kind: input, shape index: {}]
  %s3 = inlined_call_operand.vmem [shape: f32[1,32], index: 3, kind: input, shape index: {}]
  %s4 = inlined_call_operand.<no memory space> [shape: f32[1,1], index: 4, kind: input, shape index: {}]
  %s5 = inlined_call_operand.hbm [shape: bf16[16,32], index: 5, kind: input, shape index: {}]
  %s6 = inlined_call_operand.hbm [shape: bf16[32,128], index: 6, kind: input, shape index: {}]
  %s7 = inlined_call_operand.hbm [shape: f32[8,16], index: 7, kind: output, shape index: {0}]
  %s8 = inlined_call_operand.hbm [shape: f32[8,32], index: 8, kind: output, shape index: {1}]
  %s9 = inlined_call_operand.hbm [shape: f32[8,32], index: 9, kind: output, shape index: {2}]
  %s10 = inlined_call_operand.hbm [shape: f32[8,128], index: 10, kind: output, shape index: {3}]
  %s11 = inlined_call_operand.vmem [shape: f32[8,3], index: 11, kind: output, shape index: {4}]
  %12 = xla_tuple %s7, %s8, %s9, %s10, %s11
  %s13 = sld [smem:[#allocation0]]
  $region90: #{tpu_custom_call.1} parent=0
    _
  %s15 = ssub.s32 1, %s13
  %s16 = scalar_select 0, %s15, %s13
  %17 = sst [smem:[#allocation2]] %s4
  $region1: #{tpu_custom_call.1} parent=0
    #allocation3 [shape = 'u8[6144]{0}', space=vmem, size = 0x1800, scoped, tag = 'input window, operand 0, single buffered']
    #allocation4 [shape = 's32[1]{0}', space=sflag, size = 0x4, scoped, tag = 'scoped memory for tpu_custom_call.1']
    #allocation5 [shape = 's32[1]{0}', space=sflag, size = 0x4, scoped, tag = 'scoped memory for tpu_custom_call.1']
    #allocation6 [shape = 'u8[24576]{0}', space=vmem, size = 0x6000, scoped, tag = 'input window, operand 1, single buffered']
    #allocation7 [shape = 's32[1]{0}', space=sflag, size = 0x4, scoped, tag = 'scoped memory for tpu_custom_call.1']
    #allocation8 [shape = 'u8[8192]{0}', space=vmem, size = 0x2000, scoped, tag = 'input window, operand 2, single buffered']
    #allocation9 [shape = 'u8[4096]{0}', space=vmem, size = 0x1000, scoped, tag = 'input window, operand 5, single buffered']
    #allocation10 [shape = 's32[1]{0}', space=sflag, size = 0x4, scoped, tag = 'scoped memory for tpu_custom_call.1']
    #allocation11 [shape = 'u8[8192]{0}', space=vmem, size = 0x2000, scoped, tag = 'input window, operand 6, single buffered']
    #allocation12 [shape = 'u8[4096]{0}', space=vmem, size = 0x1000, scoped, tag = 'output window, operand 0, single buffered']
    #allocation13 [shape = 'u8[4096]{0}', space=vmem, size = 0x1000, scoped, tag = 'output window, operand 1, single buffered']
    #allocation14 [shape = 's32[1]{0}', space=sflag, size = 0x4, scoped, tag = 'scoped memory for tpu_custom_call.1']
    #allocation15 [shape = 'u8[4096]{0}', space=vmem, size = 0x1000, scoped, tag = 'output window, operand 2, single buffered']
    #allocation16 [shape = 'u8[4096]{0}', space=vmem, size = 0x1000, scoped, tag = 'output window, operand 3, single buffered']
    #allocation17 [shape = 's32[1]{0}', space=sflag, size = 0x4, scoped, tag = 'scoped memory for tpu_custom_call.1']
    %18 = vsyncpa [#allocation4], 0
    %19 = vsyncpa [#allocation7], 0
    %20 = vsyncpa [#allocation10], 0
    %21 = vsyncpa [#allocation5], 0
    %22 = vsyncpa [#allocation14], 0
    %23 = vsyncpa [#allocation17], 0
    // Predicated region
    $region2: #{tpu_custom_call.1} parent=1 // pred_check
      _
    $region3: #{tpu_custom_call.1} parent=1 // pred_check_branch
      %25 = sbr.rel (0) target = $region5
    $region4: #{tpu_custom_call.1} parent=1 // pred_region
      %27 = vsyncadd [#allocation4], 0
      %s28 = sshll.u32 %s0, 4
      %s29 = int_to_ptr.hbm [resolvable:$true] %s28
      %s30 = sshll.u32 [#allocation3], 4
      %s31 = int_to_ptr.vmem [resolvable:$true] %s30
      %36 = dma.hbm_to_vmem [thread:$0]  %s29, 192, %s31, [#allocation4], 64, 64, 4
    $region5: #{tpu_custom_call.1} parent=1 // pred_fallthru
      _
    // Predicated region
    $region6: #{tpu_custom_call.1} parent=1 // pred_check
      _
    $region7: #{tpu_custom_call.1} parent=1 // pred_check_branch
      %38 = sbr.rel (0) target = $region9
    $region8: #{tpu_custom_call.1} parent=1 // pred_region
      %40 = vsyncadd [#allocation7], 0
      %s41 = sshll.u32 %s1, 4
      %s42 = int_to_ptr.hbm [resolvable:$true] %s41
      %s43 = sshll.u32 [#allocation6], 4
      %s44 = int_to_ptr.vmem [resolvable:$true] %s43
      %49 = dma.hbm_to_vmem [thread:$0]  %s42, 768, %s44, [#allocation7], 64, 64, 4
    $region9: #{tpu_custom_call.1} parent=1 // pred_fallthru
      _
    // Predicated region
    $region10: #{tpu_custom_call.1} parent=1 // pred_check
      _
    $region11: #{tpu_custom_call.1} parent=1 // pred_check_branch
      %51 = sbr.rel (0) target = $region13
    $region12: #{tpu_custom_call.1} parent=1 // pred_region
      %53 = vsyncadd [#allocation7], 0
      %s54 = sshll.u32 %s2, 4
      %s55 = int_to_ptr.hbm [resolvable:$true] %s54
      %s56 = sshll.u32 [#allocation8], 4
      %s57 = int_to_ptr.vmem [resolvable:$true] %s56
      %62 = dma.hbm_to_vmem [thread:$0]  %s55, 256, %s57, [#allocation7], 64, 64, 4
    $region13: #{tpu_custom_call.1} parent=1 // pred_fallthru
      _
    // Predicated region
    $region14: #{tpu_custom_call.1} parent=1 // pred_check
      _
    $region15: #{tpu_custom_call.1} parent=1 // pred_check_branch
      %64 = sbr.rel (0) target = $region17
    $region16: #{tpu_custom_call.1} parent=1 // pred_region
      _
    $region17: #{tpu_custom_call.1} parent=1 // pred_fallthru
      _
    // Predicated region
    $region18: #{tpu_custom_call.1} parent=1 // pred_check
      _
    $region19: #{tpu_custom_call.1} parent=1 // pred_check_branch
      %66 = sbr.rel (0) target = $region21
    $region20: #{tpu_custom_call.1} parent=1 // pred_region
      _
    $region21: #{tpu_custom_call.1} parent=1 // pred_fallthru
      _
    // Predicated region
    $region22: #{tpu_custom_call.1} parent=1 // pred_check
      _
    $region23: #{tpu_custom_call.1} parent=1 // pred_check_branch
      %68 = sbr.rel (0) target = $region25
    $region24: #{tpu_custom_call.1} parent=1 // pred_region
      %70 = vsyncadd [#allocation10], 0
      %s71 = sshll.u32 %s5, 4
      %s72 = int_to_ptr.hbm [resolvable:$true] %s71
      %s73 = sshll.u32 [#allocation9], 4
      %s74 = int_to_ptr.vmem [resolvable:$true] %s73
      %79 = dma.hbm_to_vmem [thread:$0]  %s72, 128, %s74, [#allocation10], 64, 64, 4
    $region25: #{tpu_custom_call.1} parent=1 // pred_fallthru
      _
    // Predicated region
    $region26: #{tpu_custom_call.1} parent=1 // pred_check
      _
    $region27: #{tpu_custom_call.1} parent=1 // pred_check_branch
      %81 = sbr.rel (0) target = $region29
    $region28: #{tpu_custom_call.1} parent=1 // pred_region
      %83 = vsyncadd [#allocation10], 0
      %s84 = sshll.u32 %s6, 4
      %s85 = int_to_ptr.hbm [resolvable:$true] %s84
      %s86 = sshll.u32 [#allocation11], 4
      %s87 = int_to_ptr.vmem [resolvable:$true] %s86
      %92 = dma.hbm_to_vmem [thread:$0]  %s85, 256, %s87, [#allocation10], 64, 64, 4
    $region29: #{tpu_custom_call.1} parent=1 // pred_fallthru
      _
    // Predicated region
    $region30: #{tpu_custom_call.1} parent=1 // pred_check
      _
    $region31: #{tpu_custom_call.1} parent=1 // pred_check_branch
      %94 = sbr.rel (0) target = $region33
    $region32: #{tpu_custom_call.1} parent=1 // pred_region
      %96 = dma.done [#allocation4], 192
    $region33: #{tpu_custom_call.1} parent=1 // pred_fallthru
      _
    // Predicated region
    $region34: #{tpu_custom_call.1} parent=1 // pred_check
      _
    $region35: #{tpu_custom_call.1} parent=1 // pred_check_branch
      %98 = sbr.rel (0) target = $region37
    $region36: #{tpu_custom_call.1} parent=1 // pred_region
      %100 = dma.done [#allocation7], 768
    $region37: #{tpu_custom_call.1} parent=1 // pred_fallthru
      _
    // Predicated region
    $region38: #{tpu_custom_call.1} parent=1 // pred_check
      _
    $region39: #{tpu_custom_call.1} parent=1 // pred_check_branch
      %102 = sbr.rel (0) target = $region41
    $region40: #{tpu_custom_call.1} parent=1 // pred_region
      %104 = dma.done [#allocation7], 256
    $region41: #{tpu_custom_call.1} parent=1 // pred_fallthru
      _
    // Predicated region
    $region42: #{tpu_custom_call.1} parent=1 // pred_check
      _
    $region43: #{tpu_custom_call.1} parent=1 // pred_check_branch
      %106 = sbr.rel (0) target = $region45
    $region44: #{tpu_custom_call.1} parent=1 // pred_region
      %108 = dma.done [#allocation10], 128
    $region45: #{tpu_custom_call.1} parent=1 // pred_fallthru
      _
    // Predicated region
    $region46: #{tpu_custom_call.1} parent=1 // pred_check
      _
    $region47: #{tpu_custom_call.1} parent=1 // pred_check_branch
      %110 = sbr.rel (0) target = $region49
    $region48: #{tpu_custom_call.1} parent=1 // pred_region
      %112 = dma.done [#allocation10], 256
    $region49: #{tpu_custom_call.1} parent=1 // pred_fallthru
      _
    %v114 = vld [vmem:[#allocation8] sm:$0xf]
    %v115 = vld [vmem:[#allocation8 + $0x4] sm:$0xf]
    %v116 = vld [vmem:[#allocation8 + $0x8] sm:$0xf]
    %v117 = vld [vmem:[#allocation8 + $0xc] sm:$0xf]
    %v118 = vld [vmem:[%s3] sm:$0x1]
    %s119 = sld [smem:[#allocation2]]
    %v120 = vld [vmem:[#allocation3] sm:$0xf]
    %v121 = vld [vmem:[#allocation6] sm:$0xf]
    %v122 = vld [vmem:[#allocation6 + $0x4] sm:$0xf]
    %v123 = vld [vmem:[#allocation6 + $0x8] sm:$0xf]
    %v124 = vld [vmem:[#allocation6 + $0xc] sm:$0xf]
    %v129 = vunpack.c.l.b16 %v121
    %v130 = vunpack.c.l.b16 %v122
    %v131 = vunpack.c.l.b16 %v123
    %v132 = vunpack.c.l.b16 %v124
    %v133 = vpack.c.b16 %v130, %v129
    %v134 = vpack.c.b16 %v132, %v131
    %vm137 = vcmask 261120
    %v139 = vsel %vm137, %v120, 0
    %141 = vmatpush.bf16.msra.mxu0 0
    %142 = vmatpush.bf16.msra.mxu0 0
    %143 = vmatpush.bf16.msra.mxu0 0
    %144 = vmatpush.bf16.msra.mxu0 0
    %145 = vmatpush.bf16.msra.mxu0 0
    %146 = vmatpush.bf16.msra.mxu0 0
    %147 = vmatpush.bf16.msra.mxu0 %v134
    %148 = vmatpush.bf16.msra.mxu0 %v133
    %149 = vmatmul.bf16.gmra.mxu0 %v139
    %v150 = vpop.f32.mrf.mxu0
    %v151 = vadd.f32 0.0, %v150
    %v152 = vpop.f32.mrf.mxu0
    %153 = vdwg.mxu0
    %v154 = vxor.u32 %v151, 2147483648
    %v155 = vmul.f32 %v154, 1.442695
    %v156 = vpow.pop %v155
    %v157 = vadd.f32 %v156, 1.0
    %v158 = vrcp.pop %v157
    %v159 = vmul.f32 %v157, %v158
    %v160 = vsub.f32 1.0, %v159
    %v161 = vmul.f32 %v158, %v160
    %v162 = vadd.f32 %v158, %v161
    %vm163 = vweird.f32 %v157
    %vm164 = vweird.f32 %v158
    %vm165 = vmor %vm163, %vm164
    %v166 = vsel %vm165, %v158, %v162
    %v167 = vand.u32 2147483647, %v157
    %vm168 = vcmp.eq.f32.partialorder %v167, 8.507059e+37
    %v169 = vand.u32 %v157, 2147483648
    %v170 = vor.u32 1.1754944e-38, %v169
    %v171 = vsel %vm168, %v170, %v166
    %v172 = vmul.f32 1.0, %v171
    %s173 = scalar_lea.vmem [#allocation3], 4
    %v174 = vld [vmem:[%s173] sm:$0xf]
    %s175 = scalar_lea.vmem [#allocation6], 16
    %v176 = vld [vmem:[%s175] sm:$0xf]
    %v177 = vld [vmem:[%s175 + $0x4] sm:$0xf]
    %v178 = vld [vmem:[%s175 + $0x8] sm:$0xf]
    %v179 = vld [vmem:[%s175 + $0xc] sm:$0xf]
    %v184 = vunpack.c.l.b16 %v176
    %v185 = vunpack.c.l.b16 %v177
    %v186 = vunpack.c.l.b16 %v178
    %v187 = vunpack.c.l.b16 %v179
    %v188 = vpack.c.b16 %v185, %v184
    %v189 = vpack.c.b16 %v187, %v186
    %v193 = vsel %vm137, %v174, 0
    %195 = vmatpush.bf16.msra.mxu0 0
    %196 = vmatpush.bf16.msra.mxu0 0
    %197 = vmatpush.bf16.msra.mxu0 0
    %198 = vmatpush.bf16.msra.mxu0 0
    %199 = vmatpush.bf16.msra.mxu0 0
    %200 = vmatpush.bf16.msra.mxu0 0
    %201 = vmatpush.bf16.msra.mxu0 %v189
    %202 = vmatpush.bf16.msra.mxu0 %v188
    %203 = vmatmul.bf16.gmra.mxu0 %v193
    %v204 = vpop.f32.mrf.mxu0
    %v205 = vadd.f32 0.0, %v204
    %v206 = vpop.f32.mrf.mxu0
    %207 = vdwg.mxu0
    %v208 = vxor.u32 %v205, 2147483648
    %v209 = vmul.f32 %v208, 1.442695
    %v210 = vpow.pop %v209
    %v211 = vadd.f32 %v210, 1.0
    %v212 = vrcp.pop %v211
    %v213 = vmul.f32 %v211, %v212
    %v214 = vsub.f32 1.0, %v213
    %v215 = vmul.f32 %v212, %v214
    %v216 = vadd.f32 %v212, %v215
    %vm217 = vweird.f32 %v211
    %vm218 = vweird.f32 %v212
    %vm219 = vmor %vm217, %vm218
    %v220 = vsel %vm219, %v212, %v216
    %v221 = vand.u32 2147483647, %v211
    %vm222 = vcmp.eq.f32.partialorder %v221, 8.507059e+37
    %v223 = vand.u32 %v211, 2147483648
    %v224 = vor.u32 1.1754944e-38, %v223
    %v225 = vsel %vm222, %v224, %v220
    %v226 = vmul.f32 1.0, %v225
    %s227 = scalar_lea.vmem [#allocation3], 8
    %v228 = vld [vmem:[%s227] sm:$0xf]
    %s229 = scalar_lea.vmem [#allocation6], 32
    %v230 = vld [vmem:[%s229] sm:$0xf]
    %v231 = vld [vmem:[%s229 + $0x4] sm:$0xf]
    %v232 = vld [vmem:[%s229 + $0x8] sm:$0xf]
    %v233 = vld [vmem:[%s229 + $0xc] sm:$0xf]
    %v238 = vunpack.c.l.b16 %v230
    %v239 = vunpack.c.l.b16 %v231
    %v240 = vunpack.c.l.b16 %v232
    %v241 = vunpack.c.l.b16 %v233
    %v242 = vpack.c.b16 %v239, %v238
    %v243 = vpack.c.b16 %v241, %v240
    %v247 = vsel %vm137, %v228, 0
    %249 = vmatpush.bf16.msra.mxu0 0
    %250 = vmatpush.bf16.msra.mxu0 0
    %251 = vmatpush.bf16.msra.mxu0 0
    %252 = vmatpush.bf16.msra.mxu0 0
    %253 = vmatpush.bf16.msra.mxu0 0
    %254 = vmatpush.bf16.msra.mxu0 0
    %255 = vmatpush.bf16.msra.mxu0 %v243
    %256 = vmatpush.bf16.msra.mxu0 %v242
    %257 = vmatmul.bf16.gmra.mxu0 %v247
    %v258 = vpop.f32.mrf.mxu0
    %v259 = vadd.f32 0.0, %v258
    %v260 = vpop.f32.mrf.mxu0
    %261 = vdwg.mxu0
    %v262 = vxor.u32 %v259, 2147483648
    %v263 = vmul.f32 %v262, 1.442695
    %v264 = vpow.pop %v263
    %v265 = vadd.f32 %v264, 1.0
    %v266 = vrcp.pop %v265
    %v267 = vmul.f32 %v265, %v266
    %v268 = vsub.f32 1.0, %v267
    %v269 = vmul.f32 %v266, %v268
    %v270 = vadd.f32 %v266, %v269
    %vm271 = vweird.f32 %v265
    %vm272 = vweird.f32 %v266
    %vm273 = vmor %vm271, %vm272
    %v274 = vsel %vm273, %v266, %v270
    %v275 = vand.u32 2147483647, %v265
    %vm276 = vcmp.eq.f32.partialorder %v275, 8.507059e+37
    %v277 = vand.u32 %v265, 2147483648
    %v278 = vor.u32 1.1754944e-38, %v277
    %v279 = vsel %vm276, %v278, %v274
    %v280 = vmul.f32 1.0, %v279
    %v281 = vpack.c.bf16 %v226, %v172
    %v282 = vpack.c.bf16 %v280, %v280
    %v287 = vunpack.c.l.b16 %v114
    %v288 = vunpack.c.l.b16 %v115
    %v289 = vunpack.c.l.b16 %v116
    %v290 = vunpack.c.l.b16 %v117
    %v291 = vpack.c.b16 %v288, %v287
    %v292 = vpack.c.b16 %v290, %v289
    %v296 = vsel %vm137, %v281, 0
    %v299 = vsel %vm137, %v282, 0
    %301 = vmatpush.bf16.msra.mxu0 0
    %302 = vmatpush.bf16.msra.mxu0 0
    %303 = vmatpush.bf16.msra.mxu0 0
    %304 = vmatpush.bf16.msra.mxu0 0
    %305 = vmatpush.bf16.msra.mxu0 0
    %306 = vmatpush.bf16.msra.mxu0 0
    %307 = vmatpush.bf16.msra.mxu0 %v292
    %308 = vmatpush.bf16.msra.mxu0 %v291
    %309 = vmatmul.bf16.gmra.mxu0 %v296
    %v310 = vpop.f32.mrf.mxu0
    %v311 = vadd.f32 0.0, %v310
    %v312 = vpop.f32.mrf.mxu0
    %v313 = vadd.f32 0.0, %v312
    %314 = vmatmul.bf16.gmra.mxu0 %v299
    %v315 = vpop.f32.mrf.mxu0
    %v316 = vadd.f32 0.0, %v315
    %v317 = vpop.f32.mrf.mxu0
    %318 = vdwg.mxu0
    %v319 = vtanh.pop %v311
    %v320 = vtanh.pop %v313
    %v321 = vtanh.pop %v316
    %v323 = vperm.slane %v118, 0
    %v325 = vmul.f32 %v319, %v323
    %v326 = vmul.f32 %v320, %v323
    %v327 = vmul.f32 %v321, %v323
    %v328 = vsel %vm137, %v325, 0.0
    %329 = vadd.xlane.f32.xlu0 %v328
    %v330 = vpop.xlane.xlu0 %329
    %v331 = vsel %vm137, %v326, 0.0
    %332 = vadd.xlane.f32.xlu0 %v331
    %v333 = vpop.xlane.xlu0 %332
    %v334 = vsel %vm137, %v327, 0.0
    %335 = vadd.xlane.f32.xlu0 %v334
    %v336 = vpop.xlane.xlu0 %335
    %v337 = vstv %s119
    %v338 = vadd.f32 %v330, %v337
    %v339 = vadd.f32 %v333, %v337
    %v340 = vadd.f32 %v336, %v337
    %v341 = vmax.f32 %v338, %v339
    %v342 = vmax.f32 %v341, %v340
    %v343 = vsub.f32 %v338, %v342
    %v344 = vmul.f32 %v343, 1.442695
    %v345 = vpow.pop %v344
    %v346 = vsub.f32 %v339, %v342
    %v347 = vmul.f32 %v346, 1.442695
    %v348 = vpow.pop %v347
    %v349 = vsub.f32 %v340, %v342
    %v350 = vmul.f32 %v349, 1.442695
    %v351 = vpow.pop %v350
    %v352 = vadd.f32 %v345, %v348
    %v353 = vadd.f32 %v352, %v351
    %v354 = vrcp.pop %v353
    %v355 = vmul.f32 %v353, %v354
    %v356 = vsub.f32 1.0, %v355
    %v357 = vmul.f32 %v354, %v356
    %v358 = vadd.f32 %v354, %v357
    %vm359 = vweird.f32 %v353
    %vm360 = vweird.f32 %v354
    %vm361 = vmor %vm359, %vm360
    %v362 = vsel %vm361, %v354, %v358
    %v363 = vand.u32 2147483647, %v353
    %vm364 = vcmp.eq.f32.partialorder %v363, 8.507059e+37
    %v365 = vand.u32 %v353, 2147483648
    %v366 = vor.u32 1.1754944e-38, %v365
    %v367 = vsel %vm364, %v366, %v362
    %v368 = vmul.f32 1.0, %v367
    %v369 = vmul.f32 %v345, %v368
    %v370 = vmul.f32 %v348, %v368
    %v371 = vmul.f32 %v351, %v368
    %vm372 = vcmask 7168
    %373 = vst.msk [vmem:[%s11] sm:$0xff] %vm372, %v369
    %vm374 = vcmask 15368
    %375 = vst.msk [vmem:[%s11] sm:$0xff] %vm374, %v370
    %vm376 = vcmask 23568
    %377 = vst.msk [vmem:[%s11] sm:$0xff] %vm376, %v371
    %v378 = vmul.f32 %v369, %v172
    %v379 = vmul.f32 %v370, %v226
    %v380 = vadd.f32 %v378, %v379
    %v381 = vmul.f32 %v371, %v280
    %v382 = vadd.f32 %v380, %v381
    %383 = vst.msk [vmem:[#allocation13] sm:$0xff] %vm137, %v382
    %v384 = vld [vmem:[#allocation9] sm:$0xf]
    %v385 = vld [vmem:[#allocation9 + $0x4] sm:$0xf]
    %v386 = vpack.c.bf16 %v382, %v382
    %v389 = vunpack.c.l.b16 %v384
    %v390 = vunpack.c.l.b16 %v385
    %v391 = vpack.c.b16 %v390, %v389
    %v393 = vsel %vm137, %v386, 0
    %v396 = vsel %vm137, %v391, 0
    %398 = vmatpush.bf16.xpose.msra.mxu0 0
    %399 = vmatpush.bf16.xpose.msra.mxu0 0
    %400 = vmatpush.bf16.xpose.msra.mxu0 0
    %401 = vmatpush.bf16.xpose.msra.mxu0 0
    %402 = vmatpush.bf16.xpose.msra.mxu0 0
    %403 = vmatpush.bf16.xpose.msra.mxu0 0
    %404 = vmatpush.bf16.xpose.msra.mxu0 0
    %405 = vmatpush.bf16.xpose.msra.mxu0 %v396
    %406 = vmatmul.bf16.gmra.mxu0 %v393
    %v407 = vpop.f32.mrf.mxu0
    %v408 = vadd.f32 0.0, %v407
    %v409 = vpop.f32.mrf.mxu0
    %410 = vdwg.mxu0
    %v411 = vxor.u32 %v408, 2147483648
    %v412 = vmul.f32 %v411, 1.442695
    %v413 = vpow.pop %v412
    %v414 = vadd.f32 %v413, 1.0
    %v415 = vrcp.pop %v414
    %v416 = vmul.f32 %v414, %v415
    %v417 = vsub.f32 1.0, %v416
    %v418 = vmul.f32 %v415, %v417
    %v419 = vadd.f32 %v415, %v418
    %vm420 = vweird.f32 %v414
    %vm421 = vweird.f32 %v415
    %vm422 = vmor %vm420, %vm421
    %v423 = vsel %vm422, %v415, %v419
    %v424 = vand.u32 2147483647, %v414
    %vm425 = vcmp.eq.f32.partialorder %v424, 8.507059e+37
    %v426 = vand.u32 %v414, 2147483648
    %v427 = vor.u32 1.1754944e-38, %v426
    %v428 = vsel %vm425, %v427, %v423
    %v429 = vmul.f32 1.0, %v428
    %vm430 = vcmask 130048
    %431 = vst.msk [vmem:[#allocation12] sm:$0xff] %vm430, %v429
    %v432 = vpack.c.bf16 %v429, %v429
    %v435 = vsel %vm430, %v432, 0
    %437 = vmatpush.bf16.msra.mxu0 0
    %438 = vmatpush.bf16.msra.mxu0 0
    %439 = vmatpush.bf16.msra.mxu0 0
    %440 = vmatpush.bf16.msra.mxu0 0
    %441 = vmatpush.bf16.msra.mxu0 0
    %442 = vmatpush.bf16.msra.mxu0 0
    %443 = vmatpush.bf16.msra.mxu0 0
    %444 = vmatpush.bf16.msra.mxu0 %v391
    %445 = vmatmul.bf16.gmra.mxu0 %v435
    %v446 = vpop.f32.mrf.mxu0
    %v447 = vadd.f32 0.0, %v446
    %v448 = vpop.f32.mrf.mxu0
    %449 = vdwg.mxu0
    %v450 = vxor.u32 %v447, 2147483648
    %v451 = vmul.f32 %v450, 1.442695
    %v452 = vpow.pop %v451
    %v453 = vadd.f32 %v452, 1.0
    %v454 = vrcp.pop %v453
    %v455 = vmul.f32 %v453, %v454
    %v456 = vsub.f32 1.0, %v455
    %v457 = vmul.f32 %v454, %v456
    %v458 = vadd.f32 %v454, %v457
    %vm459 = vweird.f32 %v453
    %vm460 = vweird.f32 %v454
    %vm461 = vmor %vm459, %vm460
    %v462 = vsel %vm461, %v454, %v458
    %v463 = vand.u32 2147483647, %v453
    %vm464 = vcmp.eq.f32.partialorder %v463, 8.507059e+37
    %v465 = vand.u32 %v453, 2147483648
    %v466 = vor.u32 1.1754944e-38, %v465
    %v467 = vsel %vm464, %v466, %v462
    %v468 = vmul.f32 1.0, %v467
    %469 = vst.msk [vmem:[#allocation15] sm:$0xff] %vm137, %v468
    %v470 = vpack.c.bf16 %v468, %v468
    %v471 = vld [vmem:[#allocation11] sm:$0xf]
    %v472 = vld [vmem:[#allocation11 + $0x4] sm:$0xf]
    %v473 = vld [vmem:[#allocation11 + $0x8] sm:$0xf]
    %v474 = vld [vmem:[#allocation11 + $0xc] sm:$0xf]
    %v479 = vunpack.c.l.b16 %v471
    %v480 = vunpack.c.l.b16 %v472
    %v481 = vunpack.c.l.b16 %v473
    %v482 = vunpack.c.l.b16 %v474
    %v483 = vpack.c.b16 %v480, %v479
    %v484 = vpack.c.b16 %v482, %v481
    %v488 = vsel %vm137, %v470, 0
    %490 = vmatpush.bf16.msra.mxu0 0
    %491 = vmatpush.bf16.msra.mxu0 0
    %492 = vmatpush.bf16.msra.mxu0 0
    %493 = vmatpush.bf16.msra.mxu0 0
    %494 = vmatpush.bf16.msra.mxu0 0
    %495 = vmatpush.bf16.msra.mxu0 0
    %496 = vmatpush.bf16.msra.mxu0 %v484
    %497 = vmatpush.bf16.msra.mxu0 %v483
    %498 = vmatmul.bf16.gmra.mxu0 %v488
    %v499 = vpop.f32.mrf.mxu0
    %v500 = vadd.f32 0.0, %v499
    %v501 = vpop.f32.mrf.mxu0
    %502 = vdwg.mxu0
    %v503 = vxor.u32 %v500, 2147483648
    %v504 = vmul.f32 %v503, 1.442695
    %v505 = vpow.pop %v504
    %v506 = vadd.f32 %v505, 1.0
    %v507 = vrcp.pop %v506
    %v508 = vmul.f32 %v506, %v507
    %v509 = vsub.f32 1.0, %v508
    %v510 = vmul.f32 %v507, %v509
    %v511 = vadd.f32 %v507, %v510
    %vm512 = vweird.f32 %v506
    %vm513 = vweird.f32 %v507
    %vm514 = vmor %vm512, %vm513
    %v515 = vsel %vm514, %v507, %v511
    %v516 = vand.u32 2147483647, %v506
    %vm517 = vcmp.eq.f32.partialorder %v516, 8.507059e+37
    %v518 = vand.u32 %v506, 2147483648
    %v519 = vor.u32 1.1754944e-38, %v518
    %v520 = vsel %vm517, %v519, %v515
    %v521 = vmul.f32 1.0, %v520
    %522 = vst [vmem:[#allocation16] sm:$0xff] %v521
    // Predicated region
    $region50: #{tpu_custom_call.1} parent=1 // pred_check
      _
    $region51: #{tpu_custom_call.1} parent=1 // pred_check_branch
      %524 = sbr.rel (0) target = $region53
    $region52: #{tpu_custom_call.1} parent=1 // pred_region
      %526 = vsyncadd [#allocation5], 0
      %s528 = sshll.u32 [#allocation12], 4
      %s529 = int_to_ptr.vmem [resolvable:$true] %s528
      %s530 = sshll.u32 %s7, 4
      %s531 = int_to_ptr.hbm [resolvable:$true] %s530
      %533 = dma.vmem_to_hbm [thread:$0]  %s529, 128, %s531, [#allocation5]
    $region53: #{tpu_custom_call.1} parent=1 // pred_fallthru
      _
    // Predicated region
    $region54: #{tpu_custom_call.1} parent=1 // pred_check
      _
    $region55: #{tpu_custom_call.1} parent=1 // pred_check_branch
      %535 = sbr.rel (0) target = $region57
    $region56: #{tpu_custom_call.1} parent=1 // pred_region
      %537 = vsyncadd [#allocation14], 0
      %s539 = sshll.u32 [#allocation13], 4
      %s540 = int_to_ptr.vmem [resolvable:$true] %s539
      %s541 = sshll.u32 %s8, 4
      %s542 = int_to_ptr.hbm [resolvable:$true] %s541
      %544 = dma.vmem_to_hbm [thread:$0]  %s540, 128, %s542, [#allocation14]
    $region57: #{tpu_custom_call.1} parent=1 // pred_fallthru
      _
    // Predicated region
    $region58: #{tpu_custom_call.1} parent=1 // pred_check
      _
    $region59: #{tpu_custom_call.1} parent=1 // pred_check_branch
      %546 = sbr.rel (0) target = $region61
    $region60: #{tpu_custom_call.1} parent=1 // pred_region
      %548 = vsyncadd [#allocation14], 0
      %s550 = sshll.u32 [#allocation15], 4
      %s551 = int_to_ptr.vmem [resolvable:$true] %s550
      %s552 = sshll.u32 %s9, 4
      %s553 = int_to_ptr.hbm [resolvable:$true] %s552
      %555 = dma.vmem_to_hbm [thread:$0]  %s551, 128, %s553, [#allocation14]
    $region61: #{tpu_custom_call.1} parent=1 // pred_fallthru
      _
    // Predicated region
    $region62: #{tpu_custom_call.1} parent=1 // pred_check
      _
    $region63: #{tpu_custom_call.1} parent=1 // pred_check_branch
      %557 = sbr.rel (0) target = $region65
    $region64: #{tpu_custom_call.1} parent=1 // pred_region
      %559 = vsyncadd [#allocation17], 0
      %s561 = sshll.u32 [#allocation16], 4
      %s562 = int_to_ptr.vmem [resolvable:$true] %s561
      %s563 = sshll.u32 %s10, 4
      %s564 = int_to_ptr.hbm [resolvable:$true] %s563
      %566 = dma.vmem_to_hbm [thread:$0]  %s562, 128, %s564, [#allocation17]
    $region65: #{tpu_custom_call.1} parent=1 // pred_fallthru
      _
    // Predicated region
    $region66: #{tpu_custom_call.1} parent=1 // pred_check
      _
    $region67: #{tpu_custom_call.1} parent=1 // pred_check_branch
      %568 = sbr.rel (0) target = $region69
    $region68: #{tpu_custom_call.1} parent=1 // pred_region
      _
    $region69: #{tpu_custom_call.1} parent=1 // pred_fallthru
      _
    // Predicated region
    $region70: #{tpu_custom_call.1} parent=1 // pred_check
      _
    $region71: #{tpu_custom_call.1} parent=1 // pred_check_branch
      %570 = sbr.rel (0) target = $region73
    $region72: #{tpu_custom_call.1} parent=1 // pred_region
      %572 = dma.done [#allocation5], 128
    $region73: #{tpu_custom_call.1} parent=1 // pred_fallthru
      _
    // Predicated region
    $region74: #{tpu_custom_call.1} parent=1 // pred_check
      _
    $region75: #{tpu_custom_call.1} parent=1 // pred_check_branch
      %574 = sbr.rel (0) target = $region77
    $region76: #{tpu_custom_call.1} parent=1 // pred_region
      %576 = dma.done [#allocation14], 128
    $region77: #{tpu_custom_call.1} parent=1 // pred_fallthru
      _
    // Predicated region
    $region78: #{tpu_custom_call.1} parent=1 // pred_check
      _
    $region79: #{tpu_custom_call.1} parent=1 // pred_check_branch
      %578 = sbr.rel (0) target = $region81
    $region80: #{tpu_custom_call.1} parent=1 // pred_region
      %580 = dma.done [#allocation14], 128
    $region81: #{tpu_custom_call.1} parent=1 // pred_fallthru
      _
    // Predicated region
    $region82: #{tpu_custom_call.1} parent=1 // pred_check
      _
    $region83: #{tpu_custom_call.1} parent=1 // pred_check_branch
      %582 = sbr.rel (0) target = $region85
    $region84: #{tpu_custom_call.1} parent=1 // pred_region
      %584 = dma.done [#allocation17], 128
    $region85: #{tpu_custom_call.1} parent=1 // pred_fallthru
      _
    // Predicated region
    $region86: #{tpu_custom_call.1} parent=1 // pred_check
      _
    $region87: #{tpu_custom_call.1} parent=1 // pred_check_branch
      %586 = sbr.rel (0) target = $region89
    $region88: #{tpu_custom_call.1} parent=1 // pred_region
      _
    $region89: #{tpu_custom_call.1} parent=1 // pred_fallthru
      _
    %587 = vsyncpa [#allocation4], 1
    %588 = vsyncpa [#allocation7], 1
    %589 = vsyncpa [#allocation10], 1
    %590 = vsyncpa [#allocation5], 1
    %591 = vsyncpa [#allocation14], 1
    %592 = vsyncpa [#allocation17], 1

</llo_original>
